<compile_context>
chip_gen: v7x
topology: tpu7x:2x2x1
jax: 0.10.0
libtpu: 0.0.40
codegen_flags: <defaults>
</compile_context>

<pallas_src>
import functools
import math

import jax
import jax.numpy as jnp
from jax.experimental import pallas as pl
from jax.experimental.pallas import tpu as pltpu

LANE = 128


def _round_up(x, m):
    return ((x + m - 1) // m) * m


def _vmem_capacity_bytes():
    try:
        return int(pltpu.get_tpu_info().vmem_capacity_bytes)
    except Exception:
        return 64 * 1024 * 1024          # conservative (v7x-sized) fallback


def _choose_tiles(n, h_p):
    """Pick (tm, tk, n_padded, vmem_limit_bytes) from the physical VMEM size."""
    vmem_cap = _vmem_capacity_bytes()
    budget = int(vmem_cap * 0.6)         # leave headroom for Mosaic internal scratch

    n_128 = _round_up(max(n, 1), LANE)

    def footprint(tm, tk):
        a_buf = 2 * tm * tk * 2          # A tile, bf16, double-buffered
        xwn_buf = 2 * tk * h_p * 2       # streamed XWn tile, bf16, double-buffered
        xs_buf = 2 * tm * h_p * 4        # Xself tile, f32, double-buffered
        acc = tm * h_p * 4               # resident f32 accumulator scratch
        out_buf = 2 * tm * h_p * 4       # output tile (f32 worst case)
        return a_buf + xwn_buf + xs_buf + acc + out_buf

    tm_cands = (1024, 512, 256, 128)     # big tm cuts X re-streaming
    tk_cands = (2048, 1024, 512, 256, 128)  # big tk cuts grid-step overhead

    tm_best, tk_best = 128, 128
    for tm in tm_cands:
        if tm > n_128:
            continue
        # Keep >= 2 dst tiles when possible so the "parallel" axis can feed
        # both TensorCores on v7x (megacore sharding).
        if n_128 >= 2 * LANE and tm > max(LANE, n_128 // 2):
            continue
        tk_pick = None
        for tk in tk_cands:
            if tk > n_128:
                continue
            if footprint(tm, tk) <= budget:
                tk_pick = tk
                break
        if tk_pick is not None:
            tm_best, tk_best = tm, tk_pick
            break

    n_p = _round_up(n, math.lcm(tm_best, tk_best))
    vmem_limit = int(min(vmem_cap - (8 << 20),
                         footprint(tm_best, tk_best) + (16 << 20)))
    return tm_best, tk_best, n_p, vmem_limit


def _sage_agg_kernel(a_ref, xwn_ref, xself_ref, o_ref, acc_ref, *, relu):
    """One SAGEConv('mean') layer tile (pre-projected). Grid=(dst_tiles, src_tiles).

    Reduction steps only accumulate A_tile @ XWn_tile into the f32 scratch; the
    k == last epilogue adds the pre-projected self term (bias already folded in)
    and applies relu -- no matmuls in the epilogue.
    """
    k = pl.program_id(1)

    @pl.when(k == 0)
    def _():
        acc_ref[...] = jnp.zeros_like(acc_ref)

    # (TM, TK) @ (TK, H): bf16 MXU inputs, f32 accumulation.
    acc_ref[...] += jnp.dot(a_ref[...], xwn_ref[...],
                            preferred_element_type=jnp.float32)

    @pl.when(k == pl.num_programs(1) - 1)
    def _():
        out = acc_ref[...] + xself_ref[...]
        if relu:
            out = jnp.maximum(out, 0.0)
        o_ref[...] = out.astype(o_ref.dtype)


def sage_conv(a_norm_p, x_p, w_self, w_neigh, bias, *, relu, out_dtype,
              tm, tk, vmem_limit):
    """out = A_norm @ (X @ W_neigh) + (X @ W_self + bias)   (optional relu).

    Inputs are pre-padded: A_norm (Np, Np) bf16, X (Np, Fp) bf16,
    W_* (Fp, Hp) bf16, bias (1, Hp) f32, with Np % tm == Np % tk == 0 and
    Fp, Hp multiples of 128 (lane-dense output).
    """
    n_p = x_p.shape[0]
    h_p = w_self.shape[1]

    # Pre-projection outside the kernel (plain XLA MXU matmuls, f32 accumulate).
    xwn = jnp.dot(x_p, w_neigh,
                  preferred_element_type=jnp.float32).astype(jnp.bfloat16)
    xself = jnp.dot(x_p, w_self, preferred_element_type=jnp.float32) + bias

    grid = (n_p // tm, n_p // tk)
    kernel = functools.partial(_sage_agg_kernel, relu=relu)

    return pl.pallas_call(
        kernel,
        out_shape=jax.ShapeDtypeStruct((n_p, h_p), out_dtype),
        grid_spec=pltpu.PrefetchScalarGridSpec(
            num_scalar_prefetch=0,
            grid=grid,
            in_specs=[
                # A_norm tile: dst rows i, src cols k (reduction operand).
                pl.BlockSpec((tm, tk), lambda i, k: (i, k)),
                # Pre-projected neighbor features for the current src tile.
                pl.BlockSpec((tk, h_p), lambda i, k: (k, 0)),
                # Pre-projected self term (+bias) for the current dst tile.
                pl.BlockSpec((tm, h_p), lambda i, k: (i, 0)),
            ],
            # Same output block across the reduction axis -> stays resident.
            out_specs=pl.BlockSpec((tm, h_p), lambda i, k: (i, 0)),
            scratch_shapes=[pltpu.VMEM((tm, h_p), jnp.float32)],
        ),
        compiler_params=pltpu.CompilerParams(
            dimension_semantics=("parallel", "arbitrary"),
            vmem_limit_bytes=vmem_limit,
        ),
    )(a_norm_p, xwn, xself)


def graphsage_forward(a_norm, x, params):
    """Two-layer GraphSAGE: relu(conv1) -> conv2. Handles padding + dtypes."""
    n, in_feats = x.shape
    h_feats = params["w_self1"].shape[1]

    f_p = _round_up(in_feats, LANE)
    h_p = _round_up(h_feats, LANE)
    tm, tk, n_p, vmem_limit = _choose_tiles(n, h_p)

    def pad2(a, r, c, dtype):
        out = jnp.zeros((r, c), dtype)
        return out.at[:a.shape[0], :a.shape[1]].set(a.astype(dtype))

    a_p = pad2(a_norm, n_p, n_p, jnp.bfloat16)
    x_p = pad2(x, n_p, f_p, jnp.bfloat16)

    ws1 = pad2(params["w_self1"], f_p, h_p, jnp.bfloat16)
    wn1 = pad2(params["w_neigh1"], f_p, h_p, jnp.bfloat16)
    b1 = pad2(params["b1"].reshape(1, -1), 1, h_p, jnp.float32)
    ws2 = pad2(params["w_self2"], h_p, h_p, jnp.bfloat16)
    wn2 = pad2(params["w_neigh2"], h_p, h_p, jnp.bfloat16)
    b2 = pad2(params["b2"].reshape(1, -1), 1, h_p, jnp.float32)

    # Layer 1 (+relu); inter-layer activation kept in bf16 (half the HBM bytes).
    h1 = sage_conv(a_p, x_p, ws1, wn1, b1, relu=True,
                   out_dtype=jnp.bfloat16, tm=tm, tk=tk, vmem_limit=vmem_limit)
    # Layer 2; final output in f32.
    h2 = sage_conv(a_p, h1, ws2, wn2, b2, relu=False,
                   out_dtype=jnp.float32, tm=tm, tk=tk, vmem_limit=vmem_limit)

    return h2[:n, :h_feats]


if __name__ == "__main__":
    # Small shapes consistent with the module: N nodes, in_feats -> h_feats -> h_feats.
    N = 16
    in_feats = 8
    h_feats = 32

    key = jax.random.PRNGKey(0)
    k_adj, k_x, k1, k2, k3, k4 = jax.random.split(key, 6)

    # Deterministic random directed graph; rows normalized by in-degree ('mean').
    adj = (jax.random.uniform(k_adj, (N, N)) < 0.3).astype(jnp.float32)
    adj = adj * (1.0 - jnp.eye(N, dtype=jnp.float32))
    deg = jnp.maximum(adj.sum(axis=1, keepdims=True), 1.0)
    a_norm = adj / deg

    x = jax.random.normal(k_x, (N, in_feats), dtype=jnp.float32)

    # Deterministic parameter init (fc_self / fc_neigh / bias, stored as (in, out)).
    def init_linear(k, fan_in, fan_out):
        scale = 1.0 / jnp.sqrt(jnp.asarray(fan_in, jnp.float32))
        return jax.random.uniform(k, (fan_in, fan_out), jnp.float32, -scale, scale)

    params = {
        "w_self1": init_linear(k1, in_feats, h_feats),
        "w_neigh1": init_linear(k2, in_feats, h_feats),
        "b1": jnp.zeros((h_feats,), jnp.float32),
        "w_self2": init_linear(k3, h_feats, h_feats),
        "w_neigh2": init_linear(k4, h_feats, h_feats),
        "b2": jnp.zeros((h_feats,), jnp.float32),
    }

    out = graphsage_forward(a_norm, x, params)
    jax.block_until_ready(out)

    # Pure-JAX reference with the same pre-projection / bf16-input quantization.
    def _q(v):
        return v.astype(jnp.bfloat16)

    def ref_layer(a_bf16, h_bf16, ws, wn, b, relu):
        xwn = jnp.dot(h_bf16, _q(wn),
                      preferred_element_type=jnp.float32).astype(jnp.bfloat16)
        xself = jnp.dot(h_bf16, _q(ws), preferred_element_type=jnp.float32) + b
        y = jnp.dot(a_bf16, xwn, preferred_element_type=jnp.float32) + xself
        return jnp.maximum(y, 0.0) if relu else y

    a_q = _q(a_norm)
    r1 = ref_layer(a_q, _q(x), params["w_self1"], params["w_neigh1"],
                   params["b1"], True)
    r1 = _q(r1)                          # inter-layer activation stored in bf16
    ref = ref_layer(a_q, r1, params["w_self2"], params["w_neigh2"],
                    params["b2"], False)

    assert out.shape == (N, h_feats)
    assert jnp.allclose(out, ref, atol=5e-3, rtol=5e-3), \
        float(jnp.max(jnp.abs(out - ref)))

    print("KERNEL_OK")
</pallas_src>

<mosaic_0001>
module attributes {stable_mosaic.version = 11 : i64} {
  func.func @_sage_agg_kernel(%arg0: i32, %arg1: i32, %arg2: memref<128x128xbf16, #tpu.memory_space<vmem>>, %arg3: memref<128x128xbf16, #tpu.memory_space<vmem>>, %arg4: memref<128x128xf32, #tpu.memory_space<vmem>>, %arg5: memref<128x128xbf16, #tpu.memory_space<vmem>>, %arg6: memref<128x128xf32, #tpu.memory_space<vmem>>) attributes {dimension_semantics = [#tpu.dimension_semantics<parallel>, #tpu.dimension_semantics<arbitrary>], iteration_bounds = array<i64: 1, 1>, scalar_prefetch = 0 : i64, scratch_operands = 1 : i64, tpu.core_type = #tpu.core_type<tc>, window_params = [{transform_indices = @transform_0, window_bounds = array<i64: 128, 128>}, {transform_indices = @transform_1, window_bounds = array<i64: 128, 128>}, {transform_indices = @transform_2, window_bounds = array<i64: 128, 128>}, {transform_indices = @transform_3, window_bounds = array<i64: 128, 128>}]} {
    %c0_i32 = arith.constant 0 : i32
    %0 = arith.cmpi eq, %arg1, %c0_i32 : i32
    %1 = arith.extui %0 : i1 to i32
    %c0_i32_0 = arith.constant 0 : i32
    %2 = arith.cmpi ne, %1, %c0_i32_0 : i32
    scf.if %2 {
      %cst_10 = arith.constant 0.000000e+00 : f32
      %12 = vector.broadcast %cst_10 : f32 to vector<128x128xf32>
      %c0_11 = arith.constant 0 : index
      %c0_12 = arith.constant 0 : index
      %13 = vector.load %arg6[%c0_11, %c0_12] : memref<128x128xf32, #tpu.memory_space<vmem>>, vector<128x128xf32>
      tpu.vector_store %arg6[%c0_11, %c0_12], %12 {strides = array<i32>} : memref<128x128xf32, #tpu.memory_space<vmem>>, vector<128x128xf32>,
    } else {
    }
    %c0 = arith.constant 0 : index
    %c0_1 = arith.constant 0 : index
    %3 = vector.load %arg6[%c0, %c0_1] : memref<128x128xf32, #tpu.memory_space<vmem>>, vector<128x128xf32>
    %c0_2 = arith.constant 0 : index
    %c0_3 = arith.constant 0 : index
    %4 = vector.load %arg2[%c0_2, %c0_3] : memref<128x128xbf16, #tpu.memory_space<vmem>>, vector<128x128xbf16>
    %c0_4 = arith.constant 0 : index
    %c0_5 = arith.constant 0 : index
    %5 = vector.load %arg3[%c0_4, %c0_5] : memref<128x128xbf16, #tpu.memory_space<vmem>>, vector<128x128xbf16>
    %cst = arith.constant dense<0.000000e+00> : vector<128x128xf32>
    %6 = tpu.matmul %4, %5, %cst {dimension_numbers = #tpu.dot_dimension_numbers<[1], [0], [0], [1], [0, 0, 1, 1], [], []>} : vector<128x128xbf16>, vector<128x128xbf16>, vector<128x128xf32> -> vector<128x128xf32>
    %7 = arith.addf %3, %6 : vector<128x128xf32>
    %c0_6 = arith.constant 0 : index
    %c0_7 = arith.constant 0 : index
    %8 = vector.load %arg6[%c0_6, %c0_7] : memref<128x128xf32, #tpu.memory_space<vmem>>, vector<128x128xf32>
    tpu.vector_store %arg6[%c0_6, %c0_7], %7 {strides = array<i32>} : memref<128x128xf32, #tpu.memory_space<vmem>>, vector<128x128xf32>,
    %c0_i32_8 = arith.constant 0 : i32
    %9 = arith.cmpi eq, %arg1, %c0_i32_8 : i32
    %10 = arith.extui %9 : i1 to i32
    %c0_i32_9 = arith.constant 0 : i32
    %11 = arith.cmpi ne, %10, %c0_i32_9 : i32
    scf.if %11 {
      %c0_10 = arith.constant 0 : index
      %c0_11 = arith.constant 0 : index
      %12 = vector.load %arg6[%c0_10, %c0_11] : memref<128x128xf32, #tpu.memory_space<vmem>>, vector<128x128xf32>
      %c0_12 = arith.constant 0 : index
      %c0_13 = arith.constant 0 : index
      %13 = vector.load %arg4[%c0_12, %c0_13] : memref<128x128xf32, #tpu.memory_space<vmem>>, vector<128x128xf32>
      %14 = arith.addf %12, %13 : vector<128x128xf32>
      %cst_14 = arith.constant 0.000000e+00 : f32
      %15 = vector.broadcast %cst_14 : f32 to vector<128x128xf32>
      %16 = arith.maximumf %14, %15 : vector<128x128xf32>
      %17 = arith.truncf %16 : vector<128x128xf32> to vector<128x128xbf16>
      %c0_15 = arith.constant 0 : index
      %c0_16 = arith.constant 0 : index
      %18 = vector.load %arg5[%c0_15, %c0_16] : memref<128x128xbf16, #tpu.memory_space<vmem>>, vector<128x128xbf16>
      tpu.vector_store %arg5[%c0_15, %c0_16], %17 {strides = array<i32>} : memref<128x128xbf16, #tpu.memory_space<vmem>>, vector<128x128xbf16>,
    } else {
    }
    return
  }
  func.func @transform_0(%arg0: i32, %arg1: i32) -> (i32, i32) {
    %c0_i32 = arith.constant 0 : i32
    return %arg0, %arg1 : i32, i32
  }
  func.func @transform_1(%arg0: i32, %arg1: i32) -> (i32, i32) {
    %c0_i32 = arith.constant 0 : i32
    %c0_i32_0 = arith.constant 0 : i32
    return %arg1, %c0_i32 : i32, i32
  }
  func.func @transform_2(%arg0: i32, %arg1: i32) -> (i32, i32) {
    %c0_i32 = arith.constant 0 : i32
    %c0_i32_0 = arith.constant 0 : i32
    return %arg0, %c0_i32 : i32, i32
  }
  func.func @transform_3(%arg0: i32, %arg1: i32) -> (i32, i32) {
    %c0_i32 = arith.constant 0 : i32
    %c0_i32_0 = arith.constant 0 : i32
    return %arg0, %c0_i32 : i32, i32
  }
}

</mosaic_0001>

<llo_original>
// kernel: tpu_custom_call.1
$region0: #{tpu_custom_call.1}
  #allocation0 [shape = 'u32[]', space=smem, size = 0x4, offset = 0x4, fixed_abs, tag = 'smem constant byte address 0x4 - core index']
  #allocation1 [shape = 'u32[144,128]{1,0:T(1,128)}', space=vmem, size = 0x12000, scoped, tag = 'internal scratch']
  #allocation2 [shape = 'f32[128,128]{1,0:T(8,128)}', space=vmem, size = 0x10000, scoped, tag = 'scratch operand']
  %s0 = inlined_call_operand.hbm [shape: bf16[128,128], index: 0, kind: input, shape index: {}]
  %s1 = inlined_call_operand.hbm [shape: bf16[128,128], index: 1, kind: input, shape index: {}]
  %s2 = inlined_call_operand.hbm [shape: f32[128,128], index: 2, kind: input, shape index: {}]
  %s3 = inlined_call_operand.hbm [shape: bf16[128,128], index: 3, kind: output, shape index: {}]
  %s4 = sld [smem:[#allocation0]]
  $region42: #{tpu_custom_call.1} parent=0
    _
  %s6 = ssub.s32 1, %s4
  %s7 = scalar_select 0, %s6, %s4
  $region1: #{tpu_custom_call.1} parent=0
    #allocation3 [shape = 'u8[32768]{0}', space=vmem, size = 0x8000, scoped, tag = 'input window, operand 0, single buffered']
    #allocation4 [shape = 's32[1]{0}', space=sflag, size = 0x4, scoped, tag = 'scoped memory for tpu_custom_call.1']
    #allocation5 [shape = 's32[1]{0}', space=sflag, size = 0x4, scoped, tag = 'scoped memory for tpu_custom_call.1']
    #allocation6 [shape = 'u8[32768]{0}', space=vmem, size = 0x8000, scoped, tag = 'input window, operand 1, single buffered']
    #allocation7 [shape = 's32[1]{0}', space=sflag, size = 0x4, scoped, tag = 'scoped memory for tpu_custom_call.1']
    #allocation8 [shape = 'u8[65536]{0}', space=vmem, size = 0x10000, scoped, tag = 'input window, operand 2, single buffered']
    #allocation9 [shape = 'u8[32768]{0}', space=vmem, size = 0x8000, scoped, tag = 'output window, operand 0, single buffered']
    %8 = vsyncpa [#allocation4], 0
    %9 = vsyncpa [#allocation7], 0
    %10 = vsyncpa [#allocation5], 0
    // Predicated region
    $region2: #{tpu_custom_call.1} parent=1 // pred_check
      _
    $region3: #{tpu_custom_call.1} parent=1 // pred_check_branch
      %12 = sbr.rel (0) target = $region5
    $region4: #{tpu_custom_call.1} parent=1 // pred_region
      %s14 = ssub.s32 1024, 1024
      %15 = vsyncadd [#allocation4], %s14
      %s16 = sshll.u32 [#allocation3], 4
      %s17 = int_to_ptr.vmem [resolvable:$true] %s16
      %22 = dma.hbm_to_vmem [thread:$0]  %s0, 1024, %s17, [#allocation4], 64, 64, 4
    $region5: #{tpu_custom_call.1} parent=1 // pred_fallthru
      _
    // Predicated region
    $region6: #{tpu_custom_call.1} parent=1 // pred_check
      _
    $region7: #{tpu_custom_call.1} parent=1 // pred_check_branch
      %24 = sbr.rel (0) target = $region9
    $region8: #{tpu_custom_call.1} parent=1 // pred_region
      %s26 = ssub.s32 1024, 1024
      %27 = vsyncadd [#allocation7], %s26
      %s28 = sshll.u32 [#allocation6], 4
      %s29 = int_to_ptr.vmem [resolvable:$true] %s28
      %34 = dma.hbm_to_vmem [thread:$0]  %s1, 1024, %s29, [#allocation7], 64, 64, 4
    $region9: #{tpu_custom_call.1} parent=1 // pred_fallthru
      _
    // Predicated region
    $region10: #{tpu_custom_call.1} parent=1 // pred_check
      _
    $region11: #{tpu_custom_call.1} parent=1 // pred_check_branch
      %36 = sbr.rel (0) target = $region13
    $region12: #{tpu_custom_call.1} parent=1 // pred_region
      %s38 = ssub.s32 2048, 2048
      %39 = vsyncadd [#allocation7], %s38
      %s40 = sshll.u32 [#allocation8], 4
      %s41 = int_to_ptr.vmem [resolvable:$true] %s40
      %46 = dma.hbm_to_vmem [thread:$0]  %s2, 2048, %s41, [#allocation7], 128, 128, 8
    $region13: #{tpu_custom_call.1} parent=1 // pred_fallthru
      _
    // Predicated region
    $region14: #{tpu_custom_call.1} parent=1 // pred_check
      _
    $region15: #{tpu_custom_call.1} parent=1 // pred_check_branch
      %48 = sbr.rel (0) target = $region17
    $region16: #{tpu_custom_call.1} parent=1 // pred_region
      %49 = dma.done [#allocation4], 1024
    $region17: #{tpu_custom_call.1} parent=1 // pred_fallthru
      _
    // Predicated region
    $region18: #{tpu_custom_call.1} parent=1 // pred_check
      _
    $region19: #{tpu_custom_call.1} parent=1 // pred_check_branch
      %51 = sbr.rel (0) target = $region21
    $region20: #{tpu_custom_call.1} parent=1 // pred_region
      %52 = dma.done [#allocation7], 1024
    $region21: #{tpu_custom_call.1} parent=1 // pred_fallthru
      _
    // Predicated region
    $region22: #{tpu_custom_call.1} parent=1 // pred_check
      _
    $region23: #{tpu_custom_call.1} parent=1 // pred_check_branch
      %54 = sbr.rel (0) target = $region25
    $region24: #{tpu_custom_call.1} parent=1 // pred_region
      %55 = dma.done [#allocation7], 2048
    $region25: #{tpu_custom_call.1} parent=1 // pred_fallthru
      _
    %p57 = scmp.eq.s32.totalorder 0, 0
    // Predicated region
    $region26: #{tpu_custom_call.1} parent=1 // pred_check
      %p58 = pneg %p57
    $region27: #{tpu_custom_call.1} parent=1 // pred_check_branch
      %60 = sbr.rel (%p58) target = $region29
    $region28: #{tpu_custom_call.1} parent=1 // pred_region
      %61 = vst [vmem:[#allocation2] sm:$0xff] 0.0
      %62 = vst [vmem:[#allocation2 + $0x8] sm:$0xff] 0.0
      %63 = vst [vmem:[#allocation2 + $0x10] sm:$0xff] 0.0
      %64 = vst [vmem:[#allocation2 + $0x18] sm:$0xff] 0.0
      %65 = vst [vmem:[#allocation2 + $0x20] sm:$0xff] 0.0
      %66 = vst [vmem:[#allocation2 + $0x28] sm:$0xff] 0.0
      %67 = vst [vmem:[#allocation2 + $0x30] sm:$0xff] 0.0
      %68 = vst [vmem:[#allocation2 + $0x38] sm:$0xff] 0.0
      %69 = vst [vmem:[#allocation2 + $0x40] sm:$0xff] 0.0
      %70 = vst [vmem:[#allocation2 + $0x48] sm:$0xff] 0.0
      %71 = vst [vmem:[#allocation2 + $0x50] sm:$0xff] 0.0
      %72 = vst [vmem:[#allocation2 + $0x58] sm:$0xff] 0.0
      %73 = vst [vmem:[#allocation2 + $0x60] sm:$0xff] 0.0
      %74 = vst [vmem:[#allocation2 + $0x68] sm:$0xff] 0.0
      %75 = vst [vmem:[#allocation2 + $0x70] sm:$0xff] 0.0
      %76 = vst [vmem:[#allocation2 + $0x78] sm:$0xff] 0.0
    $region29: #{tpu_custom_call.1} parent=1 // pred_fallthru
      _
    %v77 = vld [vmem:[#allocation2] sm:$0xff]
    %v78 = vld [vmem:[#allocation2 + $0x8] sm:$0xff]
    %v79 = vld [vmem:[#allocation2 + $0x10] sm:$0xff]
    %v80 = vld [vmem:[#allocation2 + $0x18] sm:$0xff]
    %v81 = vld [vmem:[#allocation2 + $0x20] sm:$0xff]
    %v82 = vld [vmem:[#allocation2 + $0x28] sm:$0xff]
    %v83 = vld [vmem:[#allocation2 + $0x30] sm:$0xff]
    %v84 = vld [vmem:[#allocation2 + $0x38] sm:$0xff]
    %v85 = vld [vmem:[#allocation2 + $0x40] sm:$0xff]
    %v86 = vld [vmem:[#allocation2 + $0x48] sm:$0xff]
    %v87 = vld [vmem:[#allocation2 + $0x50] sm:$0xff]
    %v88 = vld [vmem:[#allocation2 + $0x58] sm:$0xff]
    %v89 = vld [vmem:[#allocation2 + $0x60] sm:$0xff]
    %v90 = vld [vmem:[#allocation2 + $0x68] sm:$0xff]
    %v91 = vld [vmem:[#allocation2 + $0x70] sm:$0xff]
    %v92 = vld [vmem:[#allocation2 + $0x78] sm:$0xff]
    %v93 = vld [vmem:[#allocation3] sm:$0xf]
    %v94 = vld [vmem:[#allocation3 + $0x4] sm:$0xf]
    %v95 = vld [vmem:[#allocation3 + $0x8] sm:$0xf]
    %v96 = vld [vmem:[#allocation3 + $0xc] sm:$0xf]
    %v97 = vld [vmem:[#allocation3 + $0x10] sm:$0xf]
    %v98 = vld [vmem:[#allocation3 + $0x14] sm:$0xf]
    %v99 = vld [vmem:[#allocation3 + $0x18] sm:$0xf]
    %v100 = vld [vmem:[#allocation3 + $0x1c] sm:$0xf]
    %v101 = vld [vmem:[#allocation3 + $0x20] sm:$0xf]
    %v102 = vld [vmem:[#allocation3 + $0x24] sm:$0xf]
    %v103 = vld [vmem:[#allocation3 + $0x28] sm:$0xf]
    %v104 = vld [vmem:[#allocation3 + $0x2c] sm:$0xf]
    %v105 = vld [vmem:[#allocation3 + $0x30] sm:$0xf]
    %v106 = vld [vmem:[#allocation3 + $0x34] sm:$0xf]
    %v107 = vld [vmem:[#allocation3 + $0x38] sm:$0xf]
    %v108 = vld [vmem:[#allocation3 + $0x3c] sm:$0xf]
    %v109 = vld [vmem:[#allocation6] sm:$0xf]
    %v110 = vld [vmem:[#allocation6 + $0x4] sm:$0xf]
    %v111 = vld [vmem:[#allocation6 + $0x8] sm:$0xf]
    %v112 = vld [vmem:[#allocation6 + $0xc] sm:$0xf]
    %v113 = vld [vmem:[#allocation6 + $0x10] sm:$0xf]
    %v114 = vld [vmem:[#allocation6 + $0x14] sm:$0xf]
    %v115 = vld [vmem:[#allocation6 + $0x18] sm:$0xf]
    %v116 = vld [vmem:[#allocation6 + $0x1c] sm:$0xf]
    %v117 = vld [vmem:[#allocation6 + $0x20] sm:$0xf]
    %v118 = vld [vmem:[#allocation6 + $0x24] sm:$0xf]
    %v119 = vld [vmem:[#allocation6 + $0x28] sm:$0xf]
    %v120 = vld [vmem:[#allocation6 + $0x2c] sm:$0xf]
    %v121 = vld [vmem:[#allocation6 + $0x30] sm:$0xf]
    %v122 = vld [vmem:[#allocation6 + $0x34] sm:$0xf]
    %v123 = vld [vmem:[#allocation6 + $0x38] sm:$0xf]
    %v124 = vld [vmem:[#allocation6 + $0x3c] sm:$0xf]
    %v141 = vunpack.c.l.b16 %v93
    %v142 = vunpack.c.l.b16 %v94
    %v143 = vunpack.c.l.b16 %v95
    %v144 = vunpack.c.l.b16 %v96
    %v145 = vunpack.c.l.b16 %v97
    %v146 = vunpack.c.l.b16 %v98
    %v147 = vunpack.c.l.b16 %v99
    %v148 = vunpack.c.l.b16 %v100
    %v149 = vunpack.c.l.b16 %v101
    %v150 = vunpack.c.l.b16 %v102
    %v151 = vunpack.c.l.b16 %v103
    %v152 = vunpack.c.l.b16 %v104
    %v153 = vunpack.c.l.b16 %v105
    %v154 = vunpack.c.l.b16 %v106
    %v155 = vunpack.c.l.b16 %v107
    %v156 = vunpack.c.l.b16 %v108
    %v157 = vpack.c.b16 %v142, %v141
    %v158 = vpack.c.b16 %v144, %v143
    %v159 = vpack.c.b16 %v146, %v145
    %v160 = vpack.c.b16 %v148, %v147
    %v161 = vpack.c.b16 %v150, %v149
    %v162 = vpack.c.b16 %v152, %v151
    %v163 = vpack.c.b16 %v154, %v153
    %v164 = vpack.c.b16 %v156, %v155
    %v189 = vunpack.c.l.b16 %v109
    %v190 = vunpack.c.l.b16 %v110
    %v191 = vunpack.c.l.b16 %v111
    %v192 = vunpack.c.l.b16 %v112
    %v193 = vunpack.c.l.b16 %v113
    %v194 = vunpack.c.l.b16 %v114
    %v195 = vunpack.c.l.b16 %v115
    %v196 = vunpack.c.l.b16 %v116
    %v197 = vunpack.c.l.b16 %v117
    %v198 = vunpack.c.l.b16 %v118
    %v199 = vunpack.c.l.b16 %v119
    %v200 = vunpack.c.l.b16 %v120
    %v201 = vunpack.c.l.b16 %v121
    %v202 = vunpack.c.l.b16 %v122
    %v203 = vunpack.c.l.b16 %v123
    %v204 = vunpack.c.l.b16 %v124
    %v205 = vpack.c.b16 %v190, %v189
    %v206 = vpack.c.b16 %v192, %v191
    %v207 = vpack.c.b16 %v194, %v193
    %v208 = vpack.c.b16 %v196, %v195
    %v209 = vpack.c.b16 %v198, %v197
    %v210 = vpack.c.b16 %v200, %v199
    %v211 = vpack.c.b16 %v202, %v201
    %v212 = vpack.c.b16 %v204, %v203
    %221 = vmatprep.subr.bf16.mxu0 0
    %222 = vmatpush1.bf16.msra.mxu0 %v205
    %223 = vmatprep.subr.bf16.mxu0 0
    %224 = vmatpush1.bf16.msra.mxu0 %v206
    %225 = vmatprep.subr.bf16.mxu0 0
    %226 = vmatpush1.bf16.msra.mxu0 %v207
    %227 = vmatprep.subr.bf16.mxu0 0
    %228 = vmatpush1.bf16.msra.mxu0 %v208
    %229 = vmatprep.subr.bf16.mxu0 0
    %230 = vmatpush1.bf16.msra.mxu0 %v209
    %231 = vmatprep.subr.bf16.mxu0 0
    %232 = vmatpush1.bf16.msra.mxu0 %v210
    %233 = vmatprep.subr.bf16.mxu0 0
    %234 = vmatpush1.bf16.msra.mxu0 %v211
    %235 = vmatprep.subr.bf16.mxu0 0
    %236 = vmatpush1.bf16.msra.mxu0 %v212
    %237 = vmatprep.subr.bf16.mxu0 0
    %238 = vmatpush1.bf16.msra.mxu0 0
    %239 = vmatprep.subr.bf16.mxu0 0
    %240 = vmatpush1.bf16.msra.mxu0 0
    %241 = vmatprep.subr.bf16.mxu0 0
    %242 = vmatpush1.bf16.msra.mxu0 0
    %243 = vmatprep.subr.bf16.mxu0 0
    %244 = vmatpush1.bf16.msra.mxu0 0
    %245 = vmatprep.subr.bf16.mxu0 0
    %246 = vmatpush1.bf16.msra.mxu0 0
    %247 = vmatprep.subr.bf16.mxu0 0
    %248 = vmatpush1.bf16.msra.mxu0 0
    %249 = vmatprep.subr.bf16.mxu0 0
    %250 = vmatpush1.bf16.msra.mxu0 0
    %251 = vmatprep.subr.bf16.mxu0 0
    %252 = vmatpush1.bf16.msra.mxu0 0
    %253 = vmatprep.mubr.bf16.mxu0 0
    %254 = vmatmul.mubr.bf16.gmra.mrb[0].mxu0 %v157
    %v255 = vpop.f32.mrb[0].mxu0
    %v256 = vadd.f32 0.0, %v255
    %v257 = vpop.f32.mrb[0].mxu0
    %v258 = vpop.f32.mrb[0].mxu0
    %v259 = vadd.f32 0.0, %v258
    %v260 = vpop.f32.mrb[0].mxu0
    %261 = vmatprep.mubr.bf16.mxu0 0
    %262 = vmatmul.mubr.bf16.gmra.mrb[0].mxu0 %v158
    %v263 = vpop.f32.mrb[0].mxu0
    %v264 = vadd.f32 0.0, %v263
    %v265 = vpop.f32.mrb[0].mxu0
    %v266 = vpop.f32.mrb[0].mxu0
    %v267 = vadd.f32 0.0, %v266
    %v268 = vpop.f32.mrb[0].mxu0
    %269 = vmatprep.mubr.bf16.mxu0 0
    %270 = vmatmul.mubr.bf16.gmra.mrb[0].mxu0 %v159
    %v271 = vpop.f32.mrb[0].mxu0
    %v272 = vadd.f32 0.0, %v271
    %v273 = vpop.f32.mrb[0].mxu0
    %v274 = vpop.f32.mrb[0].mxu0
    %v275 = vadd.f32 0.0, %v274
    %v276 = vpop.f32.mrb[0].mxu0
    %277 = vmatprep.mubr.bf16.mxu0 0
    %278 = vmatmul.mubr.bf16.gmra.mrb[0].mxu0 %v160
    %v279 = vpop.f32.mrb[0].mxu0
    %v280 = vadd.f32 0.0, %v279
    %v281 = vpop.f32.mrb[0].mxu0
    %v282 = vpop.f32.mrb[0].mxu0
    %v283 = vadd.f32 0.0, %v282
    %v284 = vpop.f32.mrb[0].mxu0
    %285 = vmatprep.mubr.bf16.mxu0 0
    %286 = vmatmul.mubr.bf16.gmra.mrb[0].mxu0 %v161
    %v287 = vpop.f32.mrb[0].mxu0
    %v288 = vadd.f32 0.0, %v287
    %v289 = vpop.f32.mrb[0].mxu0
    %v290 = vpop.f32.mrb[0].mxu0
    %v291 = vadd.f32 0.0, %v290
    %v292 = vpop.f32.mrb[0].mxu0
    %293 = vmatprep.mubr.bf16.mxu0 0
    %294 = vmatmul.mubr.bf16.gmra.mrb[0].mxu0 %v162
    %v295 = vpop.f32.mrb[0].mxu0
    %v296 = vadd.f32 0.0, %v295
    %v297 = vpop.f32.mrb[0].mxu0
    %v298 = vpop.f32.mrb[0].mxu0
    %v299 = vadd.f32 0.0, %v298
    %v300 = vpop.f32.mrb[0].mxu0
    %301 = vmatprep.mubr.bf16.mxu0 0
    %302 = vmatmul.mubr.bf16.gmra.mrb[0].mxu0 %v163
    %v303 = vpop.f32.mrb[0].mxu0
    %v304 = vadd.f32 0.0, %v303
    %v305 = vpop.f32.mrb[0].mxu0
    %v306 = vpop.f32.mrb[0].mxu0
    %v307 = vadd.f32 0.0, %v306
    %v308 = vpop.f32.mrb[0].mxu0
    %309 = vmatprep.mubr.bf16.mxu0 0
    %310 = vmatmul.mubr.bf16.gmra.mrb[0].mxu0 %v164
    %v311 = vpop.f32.mrb[0].mxu0
    %v312 = vadd.f32 0.0, %v311
    %v313 = vpop.f32.mrb[0].mxu0
    %v314 = vpop.f32.mrb[0].mxu0
    %v315 = vadd.f32 0.0, %v314
    %v316 = vpop.f32.mrb[0].mxu0
    %317 = vdwg.mxu0
    %v318 = vadd.f32 %v77, %v256
    %v319 = vadd.f32 %v78, %v259
    %v320 = vadd.f32 %v79, %v264
    %v321 = vadd.f32 %v80, %v267
    %v322 = vadd.f32 %v81, %v272
    %v323 = vadd.f32 %v82, %v275
    %v324 = vadd.f32 %v83, %v280
    %v325 = vadd.f32 %v84, %v283
    %v326 = vadd.f32 %v85, %v288
    %v327 = vadd.f32 %v86, %v291
    %v328 = vadd.f32 %v87, %v296
    %v329 = vadd.f32 %v88, %v299
    %v330 = vadd.f32 %v89, %v304
    %v331 = vadd.f32 %v90, %v307
    %v332 = vadd.f32 %v91, %v312
    %v333 = vadd.f32 %v92, %v315
    %334 = vst [vmem:[#allocation2] sm:$0xff] %v318
    %335 = vst [vmem:[#allocation2 + $0x8] sm:$0xff] %v319
    %336 = vst [vmem:[#allocation2 + $0x10] sm:$0xff] %v320
    %337 = vst [vmem:[#allocation2 + $0x18] sm:$0xff] %v321
    %338 = vst [vmem:[#allocation2 + $0x20] sm:$0xff] %v322
    %339 = vst [vmem:[#allocation2 + $0x28] sm:$0xff] %v323
    %340 = vst [vmem:[#allocation2 + $0x30] sm:$0xff] %v324
    %341 = vst [vmem:[#allocation2 + $0x38] sm:$0xff] %v325
    %342 = vst [vmem:[#allocation2 + $0x40] sm:$0xff] %v326
    %343 = vst [vmem:[#allocation2 + $0x48] sm:$0xff] %v327
    %344 = vst [vmem:[#allocation2 + $0x50] sm:$0xff] %v328
    %345 = vst [vmem:[#allocation2 + $0x58] sm:$0xff] %v329
    %346 = vst [vmem:[#allocation2 + $0x60] sm:$0xff] %v330
    %347 = vst [vmem:[#allocation2 + $0x68] sm:$0xff] %v331
    %348 = vst [vmem:[#allocation2 + $0x70] sm:$0xff] %v332
    %349 = vst [vmem:[#allocation2 + $0x78] sm:$0xff] %v333
    // Predicated region
    $region30: #{tpu_custom_call.1} parent=1 // pred_check
      %p350 = pneg %p57
    $region31: #{tpu_custom_call.1} parent=1 // pred_check_branch
      %352 = sbr.rel (%p350) target = $region33
    $region32: #{tpu_custom_call.1} parent=1 // pred_region
      %v353 = vld [vmem:[#allocation2] sm:$0xff]
      %v354 = vld [vmem:[#allocation2 + $0x8] sm:$0xff]
      %v355 = vld [vmem:[#allocation2 + $0x10] sm:$0xff]
      %v356 = vld [vmem:[#allocation2 + $0x18] sm:$0xff]
      %v357 = vld [vmem:[#allocation2 + $0x20] sm:$0xff]
      %v358 = vld [vmem:[#allocation2 + $0x28] sm:$0xff]
      %v359 = vld [vmem:[#allocation2 + $0x30] sm:$0xff]
      %v360 = vld [vmem:[#allocation2 + $0x38] sm:$0xff]
      %v361 = vld [vmem:[#allocation2 + $0x40] sm:$0xff]
      %v362 = vld [vmem:[#allocation2 + $0x48] sm:$0xff]
      %v363 = vld [vmem:[#allocation2 + $0x50] sm:$0xff]
      %v364 = vld [vmem:[#allocation2 + $0x58] sm:$0xff]
      %v365 = vld [vmem:[#allocation2 + $0x60] sm:$0xff]
      %v366 = vld [vmem:[#allocation2 + $0x68] sm:$0xff]
      %v367 = vld [vmem:[#allocation2 + $0x70] sm:$0xff]
      %v368 = vld [vmem:[#allocation2 + $0x78] sm:$0xff]
      %v369 = vld [vmem:[#allocation8] sm:$0xff]
      %v370 = vld [vmem:[#allocation8 + $0x8] sm:$0xff]
      %v371 = vld [vmem:[#allocation8 + $0x10] sm:$0xff]
      %v372 = vld [vmem:[#allocation8 + $0x18] sm:$0xff]
      %v373 = vld [vmem:[#allocation8 + $0x20] sm:$0xff]
      %v374 = vld [vmem:[#allocation8 + $0x28] sm:$0xff]
      %v375 = vld [vmem:[#allocation8 + $0x30] sm:$0xff]
      %v376 = vld [vmem:[#allocation8 + $0x38] sm:$0xff]
      %v377 = vld [vmem:[#allocation8 + $0x40] sm:$0xff]
      %v378 = vld [vmem:[#allocation8 + $0x48] sm:$0xff]
      %v379 = vld [vmem:[#allocation8 + $0x50] sm:$0xff]
      %v380 = vld [vmem:[#allocation8 + $0x58] sm:$0xff]
      %v381 = vld [vmem:[#allocation8 + $0x60] sm:$0xff]
      %v382 = vld [vmem:[#allocation8 + $0x68] sm:$0xff]
      %v383 = vld [vmem:[#allocation8 + $0x70] sm:$0xff]
      %v384 = vld [vmem:[#allocation8 + $0x78] sm:$0xff]
      %v385 = vadd.f32 %v353, %v369
      %v386 = vadd.f32 %v354, %v370
      %v387 = vadd.f32 %v355, %v371
      %v388 = vadd.f32 %v356, %v372
      %v389 = vadd.f32 %v357, %v373
      %v390 = vadd.f32 %v358, %v374
      %v391 = vadd.f32 %v359, %v375
      %v392 = vadd.f32 %v360, %v376
      %v393 = vadd.f32 %v361, %v377
      %v394 = vadd.f32 %v362, %v378
      %v395 = vadd.f32 %v363, %v379
      %v396 = vadd.f32 %v364, %v380
      %v397 = vadd.f32 %v365, %v381
      %v398 = vadd.f32 %v366, %v382
      %v399 = vadd.f32 %v367, %v383
      %v400 = vadd.f32 %v368, %v384
      %v401 = vmax.f32 %v385, 0.0
      %v402 = vmax.f32 %v386, 0.0
      %v403 = vmax.f32 %v387, 0.0
      %v404 = vmax.f32 %v388, 0.0
      %v405 = vmax.f32 %v389, 0.0
      %v406 = vmax.f32 %v390, 0.0
      %v407 = vmax.f32 %v391, 0.0
      %v408 = vmax.f32 %v392, 0.0
      %v409 = vmax.f32 %v393, 0.0
      %v410 = vmax.f32 %v394, 0.0
      %v411 = vmax.f32 %v395, 0.0
      %v412 = vmax.f32 %v396, 0.0
      %v413 = vmax.f32 %v397, 0.0
      %v414 = vmax.f32 %v398, 0.0
      %v415 = vmax.f32 %v399, 0.0
      %v416 = vmax.f32 %v400, 0.0
      %v417 = vpack.c.bf16 %v402, %v401
      %v418 = vpack.c.bf16 %v404, %v403
      %v419 = vpack.c.bf16 %v406, %v405
      %v420 = vpack.c.bf16 %v408, %v407
      %v421 = vpack.c.bf16 %v410, %v409
      %v422 = vpack.c.bf16 %v412, %v411
      %v423 = vpack.c.bf16 %v414, %v413
      %v424 = vpack.c.bf16 %v416, %v415
      %v433 = vunpack.c.l.b16 %v417
      %v434 = vunpack.c.h.b16 %v417
      %v435 = vunpack.c.l.b16 %v418
      %v436 = vunpack.c.h.b16 %v418
      %v437 = vunpack.c.l.b16 %v419
      %v438 = vunpack.c.h.b16 %v419
      %v439 = vunpack.c.l.b16 %v420
      %v440 = vunpack.c.h.b16 %v420
      %v441 = vunpack.c.l.b16 %v421
      %v442 = vunpack.c.h.b16 %v421
      %v443 = vunpack.c.l.b16 %v422
      %v444 = vunpack.c.h.b16 %v422
      %v445 = vunpack.c.l.b16 %v423
      %v446 = vunpack.c.h.b16 %v423
      %v447 = vunpack.c.l.b16 %v424
      %v448 = vunpack.c.h.b16 %v424
      %v449 = vpack.c.b16 %v433, %v433
      %v450 = vpack.c.b16 %v434, %v434
      %v451 = vpack.c.b16 %v435, %v435
      %v452 = vpack.c.b16 %v436, %v436
      %v453 = vpack.c.b16 %v437, %v437
      %v454 = vpack.c.b16 %v438, %v438
      %v455 = vpack.c.b16 %v439, %v439
      %v456 = vpack.c.b16 %v440, %v440
      %v457 = vpack.c.b16 %v441, %v441
      %v458 = vpack.c.b16 %v442, %v442
      %v459 = vpack.c.b16 %v443, %v443
      %v460 = vpack.c.b16 %v444, %v444
      %v461 = vpack.c.b16 %v445, %v445
      %v462 = vpack.c.b16 %v446, %v446
      %v463 = vpack.c.b16 %v447, %v447
      %v464 = vpack.c.b16 %v448, %v448
      %481 = vst [vmem:[#allocation9] sm:$0xf] %v449
      %482 = vst [vmem:[#allocation9 + $0x4] sm:$0xf] %v450
      %483 = vst [vmem:[#allocation9 + $0x8] sm:$0xf] %v451
      %484 = vst [vmem:[#allocation9 + $0xc] sm:$0xf] %v452
      %485 = vst [vmem:[#allocation9 + $0x10] sm:$0xf] %v453
      %486 = vst [vmem:[#allocation9 + $0x14] sm:$0xf] %v454
      %487 = vst [vmem:[#allocation9 + $0x18] sm:$0xf] %v455
      %488 = vst [vmem:[#allocation9 + $0x1c] sm:$0xf] %v456
      %489 = vst [vmem:[#allocation9 + $0x20] sm:$0xf] %v457
      %490 = vst [vmem:[#allocation9 + $0x24] sm:$0xf] %v458
      %491 = vst [vmem:[#allocation9 + $0x28] sm:$0xf] %v459
      %492 = vst [vmem:[#allocation9 + $0x2c] sm:$0xf] %v460
      %493 = vst [vmem:[#allocation9 + $0x30] sm:$0xf] %v461
      %494 = vst [vmem:[#allocation9 + $0x34] sm:$0xf] %v462
      %495 = vst [vmem:[#allocation9 + $0x38] sm:$0xf] %v463
      %496 = vst [vmem:[#allocation9 + $0x3c] sm:$0xf] %v464
    $region33: #{tpu_custom_call.1} parent=1 // pred_fallthru
      _
    // Predicated region
    $region34: #{tpu_custom_call.1} parent=1 // pred_check
      _
    $region35: #{tpu_custom_call.1} parent=1 // pred_check_branch
      %498 = sbr.rel (0) target = $region37
    $region36: #{tpu_custom_call.1} parent=1 // pred_region
      %s500 = ssub.s32 1024, 1024
      %501 = vsyncadd [#allocation5], %s500
      %s502 = sshll.u32 [#allocation9], 4
      %s503 = int_to_ptr.vmem [resolvable:$true] %s502
      %508 = dma.vmem_to_hbm [thread:$0]  %s503, 1024, %s3, [#allocation5], 64, 64, 4
    $region37: #{tpu_custom_call.1} parent=1 // pred_fallthru
      _
    // Predicated region
    $region38: #{tpu_custom_call.1} parent=1 // pred_check
      _
    $region39: #{tpu_custom_call.1} parent=1 // pred_check_branch
      %510 = sbr.rel (0) target = $region41
    $region40: #{tpu_custom_call.1} parent=1 // pred_region
      %511 = dma.done [#allocation5], 1024
    $region41: #{tpu_custom_call.1} parent=1 // pred_fallthru
      _
    %512 = vsyncpa [#allocation4], 1
    %513 = vsyncpa [#allocation7], 1
    %514 = vsyncpa [#allocation5], 1

</llo_original>
